<compile_context>
chip_gen: v7x
topology: tpu7x:2x2x1
jax: 0.10.0
libtpu: 0.0.40
codegen_flags: <defaults>
</compile_context>

<pallas_src>
import jax
import jax.numpy as jnp
from jax.experimental import pallas as pl
from jax.experimental.pallas import tpu as pltpu

# ---- problem sizes (W - 2 must equal 16 so nn.Linear(16, 10) applies) ----
N, C_IN, H, W = 2, 3, 18, 18
C_OUT = 16
KH = KW = 3
HO, WO = H - KH + 1, W - KW + 1        # 16, 16
FC_IN, FC_OUT = 16, 10
FC_PAD = 16                            # pad FC output 10 -> 16 (zero lanes)
K_RAW = KH * KW * C_IN                 # 27
K_PAD = 32                             # 27 taps + 1 bias column + 4 zero pad
NR = N * HO                            # 32 rows in the lane-dense layout
LC = WO * C_OUT                        # 256 lanes (wo, c)
LF = C_OUT * FC_PAD                    # 256 lanes (c, f)
BN_EPS = 1e-5
CNT = float(N * HO * WO)               # 512 elements per channel for BN stats


def model_kernel(p_ref, w2_ref, fs_ref, g_ref, b_ref, m_ref, bf_ref, out_ref):
    # p_ref  : (32, 512)  im2col patches, lanes = (wo, k); k27 = 1.0 (bias col)
    # w2_ref : (512, 256) block-diag conv weight (+ bias row), cols = (wo, c)
    # fs_ref : (256, 256) per-channel fold-and-spread matrix (includes 1/512)
    # g_ref  : (1, 256)   BN gamma tiled to lane order (wo, c)
    # b_ref  : (1, 256)   BN beta  tiled to lane order (wo, c)
    # m_ref  : (256, 256) FC matrix mapping lanes (wo, c) -> (c, f)
    # bf_ref : (1, 256)   FC bias tiled to lane order (c, f)
    # out_ref: (32, 256)

    # Conv2d 3x3 valid (+ bias) as one lane-dense MXU matmul.
    h = jnp.dot(p_ref[...], w2_ref[...], preferred_element_type=jnp.float32)

    # BatchNorm2d training-mode batch statistics (channel = lane % 16).
    s1 = jnp.sum(h, axis=0, keepdims=True)                 # (1, 256)
    s2 = jnp.sum(h * h, axis=0, keepdims=True)             # (1, 256)
    mean = jnp.dot(s1, fs_ref[...], preferred_element_type=jnp.float32)
    ex2 = jnp.dot(s2, fs_ref[...], preferred_element_type=jnp.float32)
    var = ex2 - mean * mean                                # biased variance
    scale = g_ref[...] * jax.lax.rsqrt(var + BN_EPS)       # (1, 256)
    shift = b_ref[...] - mean * scale                      # (1, 256)

    # BN affine + ReLU, fully lane-dense.
    h = jnp.maximum(h * scale + shift, 0.0)                # (32, 256)

    # Linear(16, 10) over the conv-width axis (+ bias) + ReLU, one matmul.
    y = jnp.dot(h, m_ref[...], preferred_element_type=jnp.float32)
    out_ref[...] = jnp.maximum(y + bf_ref[...], 0.0)       # lane-dense store


def prepare_params(wc, bc, gamma, beta, wf, bf):
    """PyTorch-layout parameters -> kernel-ready constants (run once)."""
    # Conv weight (C_OUT, C_IN, KH, KW) -> (K_RAW, C_OUT), rows = (kh, kw, cin).
    wc_k = jnp.transpose(wc, (2, 3, 1, 0)).reshape(K_RAW, C_OUT)
    wc_pad = jnp.concatenate(
        [wc_k, bc.reshape(1, C_OUT),
         jnp.zeros((K_PAD - K_RAW - 1, C_OUT), jnp.float32)], axis=0)  # (32,16)
    # Block-diagonal over wo: W2[wo*32 + k, wo*16 + c] = wc_pad[k, c].
    w2 = jnp.einsum('uv,kc->ukvc', jnp.eye(WO, dtype=jnp.float32),
                    wc_pad).reshape(WO * K_PAD, LC)                    # (512,256)
    # Fold-and-spread: FS[wo'*16+c', wo*16+c] = (c' == c) / 512.
    fs = jnp.tile(jnp.eye(C_OUT, dtype=jnp.float32) / CNT, (WO, WO))   # (256,256)
    g256 = jnp.tile(gamma.reshape(1, C_OUT), (1, WO))                  # (1,256)
    b256 = jnp.tile(beta.reshape(1, C_OUT), (1, WO))                   # (1,256)
    # FC weight (FC_OUT, FC_IN) -> (WO, FC_PAD) zero-padded, then
    # M[wo*16+c', c*16+f] = wf_pad[wo, f] * (c' == c).
    wf_pad = jnp.zeros((WO, FC_PAD), jnp.float32).at[:, :FC_OUT].set(wf.T)
    m = jnp.einsum('wf,ac->wacf', wf_pad,
                   jnp.eye(C_OUT, dtype=jnp.float32)).reshape(LC, LF)  # (256,256)
    bf_pad = jnp.zeros((1, FC_PAD), jnp.float32).at[0, :FC_OUT].set(bf)
    bf256 = jnp.tile(bf_pad, (1, C_OUT))                               # (1,256)
    return w2, fs, g256, b256, m, bf256


def build_patches(x_nchw):
    """NCHW input -> padded im2col matrix (NR, WO*K_PAD), lanes = (wo, k)."""
    x = x_nchw.astype(jnp.float32)
    taps = [x[:, :, kh:kh + HO, kw:kw + WO]
            for kh in range(KH) for kw in range(KW)]          # 9 x (N,CIN,HO,WO)
    p = jnp.stack(taps, axis=0).reshape(KH, KW, N, C_IN, HO, WO)
    p = jnp.transpose(p, (2, 4, 5, 0, 1, 3)).reshape(N, HO, WO, K_RAW)
    p = jnp.concatenate(
        [p, jnp.ones((N, HO, WO, 1), jnp.float32),            # bias column
         jnp.zeros((N, HO, WO, K_PAD - K_RAW - 1), jnp.float32)], axis=-1)
    return p.reshape(NR, WO * K_PAD)                          # (32, 512)


@jax.jit
def run_model(x_nchw, kparams):
    w2, fs, g256, b256, m, bf256 = kparams
    patches = build_patches(x_nchw)
    flops = 2 * (NR * (WO * K_PAD) * LC + 2 * LC * LC + NR * LC * LF)
    out = pl.pallas_call(
        model_kernel,
        out_shape=jax.ShapeDtypeStruct((NR, LF), jnp.float32),
        in_specs=[pl.BlockSpec(memory_space=pltpu.MemorySpace.VMEM)] * 7,
        out_specs=pl.BlockSpec(memory_space=pltpu.MemorySpace.VMEM),
        cost_estimate=pl.CostEstimate(flops=flops, transcendentals=LC,
                                      bytes_accessed=1_149_952),
    )(patches, w2, fs, g256, b256, m, bf256)
    # (NR, 256) -> (N, HO, C_OUT, FC_PAD) -> PyTorch (N, C_OUT, HO, FC_OUT)
    out = out.reshape(N, HO, C_OUT, FC_PAD)[..., :FC_OUT]
    return jnp.transpose(out, (0, 2, 1, 3))


def reference(x_nchw, wc, bc, gamma, beta, wf, bf):
    # Pure-JAX reference for validation (PyTorch-layout params).
    out = jax.lax.conv_general_dilated(
        x_nchw, wc, window_strides=(1, 1), padding="VALID",
        dimension_numbers=("NCHW", "OIHW", "NCHW"))
    out = out + bc.reshape(1, C_OUT, 1, 1)
    mean = jnp.mean(out, axis=(0, 2, 3), keepdims=True)
    var = jnp.mean((out - mean) ** 2, axis=(0, 2, 3), keepdims=True)
    out = (out - mean) * jax.lax.rsqrt(var + BN_EPS)
    out = out * gamma.reshape(1, C_OUT, 1, 1) + beta.reshape(1, C_OUT, 1, 1)
    out = jnp.maximum(out, 0.0)
    out = jnp.einsum("nchw,fw->nchf", out, wf) + bf.reshape(1, 1, 1, FC_OUT)
    return jnp.maximum(out, 0.0)


if __name__ == "__main__":
    key = jax.random.PRNGKey(0)
    kx, k1, k2, k3, k4, k5, k6 = jax.random.split(key, 7)
    x = jax.random.normal(kx, (N, C_IN, H, W), jnp.float32)
    wc = jax.random.normal(k1, (C_OUT, C_IN, KH, KW), jnp.float32) * 0.1
    bc = jax.random.normal(k2, (C_OUT,), jnp.float32) * 0.1
    gamma = 1.0 + 0.1 * jax.random.normal(k3, (C_OUT,), jnp.float32)
    beta = 0.1 * jax.random.normal(k4, (C_OUT,), jnp.float32)
    wf = jax.random.normal(k5, (FC_OUT, FC_IN), jnp.float32) * 0.1
    bf = jax.random.normal(k6, (FC_OUT,), jnp.float32) * 0.1

    kparams = prepare_params(wc, bc, gamma, beta, wf, bf)
    out = jax.block_until_ready(run_model(x, kparams))

    ref = jax.block_until_ready(reference(x, wc, bc, gamma, beta, wf, bf))
    assert out.shape == (N, C_OUT, HO, FC_OUT), out.shape
    if not jnp.allclose(out, ref, atol=1e-4, rtol=1e-4):
        err = float(jnp.max(jnp.abs(out - ref)))
        raise AssertionError(f"Pallas kernel mismatch vs reference (max err {err})")

    print("KERNEL_OK")
</pallas_src>

<mosaic_0001>
module attributes {stable_mosaic.version = 11 : i64} {
  func.func @model_kernel(%arg0: memref<32x512xf32, #tpu.memory_space<vmem>>, %arg1: memref<512x256xf32, #tpu.memory_space<vmem>>, %arg2: memref<256x256xf32, #tpu.memory_space<vmem>>, %arg3: memref<1x256xf32, #tpu.memory_space<vmem>>, %arg4: memref<1x256xf32, #tpu.memory_space<vmem>>, %arg5: memref<256x256xf32, #tpu.memory_space<vmem>>, %arg6: memref<1x256xf32, #tpu.memory_space<vmem>>, %arg7: memref<32x256xf32, #tpu.memory_space<vmem>>) attributes {dimension_semantics = [], scalar_prefetch = 0 : i64, scratch_operands = 0 : i64, tpu.core_type = #tpu.core_type<tc>} {
    %c0 = arith.constant 0 : index
    %c0_0 = arith.constant 0 : index
    %0 = vector.load %arg0[%c0, %c0_0] : memref<32x512xf32, #tpu.memory_space<vmem>>, vector<32x512xf32>
    %c0_1 = arith.constant 0 : index
    %c0_2 = arith.constant 0 : index
    %1 = vector.load %arg1[%c0_1, %c0_2] : memref<512x256xf32, #tpu.memory_space<vmem>>, vector<512x256xf32>
    %cst = arith.constant dense<0.000000e+00> : vector<32x256xf32>
    %2 = tpu.matmul %0, %1, %cst {dimension_numbers = #tpu.dot_dimension_numbers<[1], [0], [0], [1], [0, 0, 1, 1], [], []>} : vector<32x512xf32>, vector<512x256xf32>, vector<32x256xf32> -> vector<32x256xf32>
    %cst_3 = arith.constant dense<0.000000e+00> : vector<256xf32>
    %3 = vector.multi_reduction <add>, %2, %cst_3 [0] : vector<32x256xf32> to vector<256xf32>
    %4 = vector.shape_cast %3 : vector<256xf32> to vector<1x256xf32>
    %5 = arith.mulf %2, %2 : vector<32x256xf32>
    %cst_4 = arith.constant dense<0.000000e+00> : vector<256xf32>
    %6 = vector.multi_reduction <add>, %5, %cst_4 [0] : vector<32x256xf32> to vector<256xf32>
    %7 = vector.shape_cast %6 : vector<256xf32> to vector<1x256xf32>
    %c0_5 = arith.constant 0 : index
    %c0_6 = arith.constant 0 : index
    %8 = vector.load %arg2[%c0_5, %c0_6] : memref<256x256xf32, #tpu.memory_space<vmem>>, vector<256x256xf32>
    %cst_7 = arith.constant dense<0.000000e+00> : vector<1x256xf32>
    %9 = tpu.matmul %4, %8, %cst_7 {dimension_numbers = #tpu.dot_dimension_numbers<[1], [0], [0], [1], [0, 0, 1, 1], [], []>} : vector<1x256xf32>, vector<256x256xf32>, vector<1x256xf32> -> vector<1x256xf32>
    %c0_8 = arith.constant 0 : index
    %c0_9 = arith.constant 0 : index
    %10 = vector.load %arg2[%c0_8, %c0_9] : memref<256x256xf32, #tpu.memory_space<vmem>>, vector<256x256xf32>
    %cst_10 = arith.constant dense<0.000000e+00> : vector<1x256xf32>
    %11 = tpu.matmul %7, %10, %cst_10 {dimension_numbers = #tpu.dot_dimension_numbers<[1], [0], [0], [1], [0, 0, 1, 1], [], []>} : vector<1x256xf32>, vector<256x256xf32>, vector<1x256xf32> -> vector<1x256xf32>
    %12 = arith.mulf %9, %9 : vector<1x256xf32>
    %13 = arith.subf %11, %12 : vector<1x256xf32>
    %c0_11 = arith.constant 0 : index
    %c0_12 = arith.constant 0 : index
    %14 = vector.load %arg3[%c0_11, %c0_12] : memref<1x256xf32, #tpu.memory_space<vmem>>, vector<1x256xf32>
    %cst_13 = arith.constant 9.99999974E-6 : f32
    %15 = vector.broadcast %cst_13 : f32 to vector<1x256xf32>
    %16 = arith.addf %13, %15 : vector<1x256xf32>
    %17 = math.rsqrt %16 : vector<1x256xf32>
    %18 = arith.mulf %14, %17 : vector<1x256xf32>
    %c0_14 = arith.constant 0 : index
    %c0_15 = arith.constant 0 : index
    %19 = vector.load %arg4[%c0_14, %c0_15] : memref<1x256xf32, #tpu.memory_space<vmem>>, vector<1x256xf32>
    %20 = arith.mulf %9, %18 : vector<1x256xf32>
    %21 = arith.subf %19, %20 : vector<1x256xf32>
    %22 = vector.broadcast %18 : vector<1x256xf32> to vector<32x256xf32>
    %23 = arith.mulf %2, %22 : vector<32x256xf32>
    %24 = vector.broadcast %21 : vector<1x256xf32> to vector<32x256xf32>
    %25 = arith.addf %23, %24 : vector<32x256xf32>
    %cst_16 = arith.constant 0.000000e+00 : f32
    %26 = vector.broadcast %cst_16 : f32 to vector<32x256xf32>
    %27 = arith.maximumf %25, %26 : vector<32x256xf32>
    %c0_17 = arith.constant 0 : index
    %c0_18 = arith.constant 0 : index
    %28 = vector.load %arg5[%c0_17, %c0_18] : memref<256x256xf32, #tpu.memory_space<vmem>>, vector<256x256xf32>
    %cst_19 = arith.constant dense<0.000000e+00> : vector<32x256xf32>
    %29 = tpu.matmul %27, %28, %cst_19 {dimension_numbers = #tpu.dot_dimension_numbers<[1], [0], [0], [1], [0, 0, 1, 1], [], []>} : vector<32x256xf32>, vector<256x256xf32>, vector<32x256xf32> -> vector<32x256xf32>
    %c0_20 = arith.constant 0 : index
    %c0_21 = arith.constant 0 : index
    %30 = vector.load %arg6[%c0_20, %c0_21] : memref<1x256xf32, #tpu.memory_space<vmem>>, vector<1x256xf32>
    %31 = vector.broadcast %30 : vector<1x256xf32> to vector<32x256xf32>
    %32 = arith.addf %29, %31 : vector<32x256xf32>
    %cst_22 = arith.constant 0.000000e+00 : f32
    %33 = vector.broadcast %cst_22 : f32 to vector<32x256xf32>
    %34 = arith.maximumf %32, %33 : vector<32x256xf32>
    %c0_23 = arith.constant 0 : index
    %c0_24 = arith.constant 0 : index
    %35 = vector.load %arg7[%c0_23, %c0_24] : memref<32x256xf32, #tpu.memory_space<vmem>>, vector<32x256xf32>
    tpu.vector_store %arg7[%c0_23, %c0_24], %34 {strides = array<i32>} : memref<32x256xf32, #tpu.memory_space<vmem>>, vector<32x256xf32>,
    return
  }
}

</mosaic_0001>

<llo_original>
// kernel: run_model.1
$region0: #{run_model.1}
  #allocation0 [shape = 'u32[]', space=smem, size = 0x4, offset = 0x4, fixed_abs, tag = 'smem constant byte address 0x4 - core index']
  #allocation1 [shape = 'u32[144,128]{1,0:T(1,128)}', space=vmem, size = 0x12000, scoped, tag = 'internal scratch']
  %s0 = inlined_call_operand.vmem [shape: f32[32,512], index: 0, kind: input, shape index: {}]
  %s1 = inlined_call_operand.vmem [shape: f32[512,256], index: 1, kind: input, shape index: {}]
  %s2 = inlined_call_operand.vmem [shape: f32[256,256], index: 2, kind: input, shape index: {}]
  %s3 = inlined_call_operand.vmem [shape: f32[1,256], index: 3, kind: input, shape index: {}]
  %s4 = inlined_call_operand.vmem [shape: f32[1,256], index: 4, kind: input, shape index: {}]
  %s5 = inlined_call_operand.vmem [shape: f32[256,256], index: 5, kind: input, shape index: {}]
  %s6 = inlined_call_operand.vmem [shape: f32[1,256], index: 6, kind: input, shape index: {}]
  %s7 = inlined_call_operand.vmem [shape: f32[32,256], index: 7, kind: output, shape index: {}]
  %s8 = sld [smem:[#allocation0]]
  $region38: #{run_model.1} parent=0
    _
  %s10 = ssub.s32 1, %s8
  %s11 = scalar_select 0, %s10, %s8
  // Predicated region
  $region2: #{run_model.1} parent=0 // pred_check
    _
  $region3: #{run_model.1} parent=0 // pred_check_branch
    %13 = sbr.rel (0) target = $region5
  $region4: #{run_model.1} parent=0 // pred_region
    _
  $region5: #{run_model.1} parent=0 // pred_fallthru
    _
  // Predicated region
  $region6: #{run_model.1} parent=0 // pred_check
    _
  $region7: #{run_model.1} parent=0 // pred_check_branch
    %15 = sbr.rel (0) target = $region9
  $region8: #{run_model.1} parent=0 // pred_region
    _
  $region9: #{run_model.1} parent=0 // pred_fallthru
    _
  // Predicated region
  $region10: #{run_model.1} parent=0 // pred_check
    _
  $region11: #{run_model.1} parent=0 // pred_check_branch
    %17 = sbr.rel (0) target = $region13
  $region12: #{run_model.1} parent=0 // pred_region
    _
  $region13: #{run_model.1} parent=0 // pred_fallthru
    _
  // Predicated region
  $region14: #{run_model.1} parent=0 // pred_check
    _
  $region15: #{run_model.1} parent=0 // pred_check_branch
    %19 = sbr.rel (0) target = $region17
  $region16: #{run_model.1} parent=0 // pred_region
    _
  $region17: #{run_model.1} parent=0 // pred_fallthru
    _
  // Predicated region
  $region18: #{run_model.1} parent=0 // pred_check
    _
  $region19: #{run_model.1} parent=0 // pred_check_branch
    %21 = sbr.rel (0) target = $region21
  $region20: #{run_model.1} parent=0 // pred_region
    _
  $region21: #{run_model.1} parent=0 // pred_fallthru
    _
  // Predicated region
  $region22: #{run_model.1} parent=0 // pred_check
    _
  $region23: #{run_model.1} parent=0 // pred_check_branch
    %23 = sbr.rel (0) target = $region25
  $region24: #{run_model.1} parent=0 // pred_region
    _
  $region25: #{run_model.1} parent=0 // pred_fallthru
    _
  // Predicated region
  $region26: #{run_model.1} parent=0 // pred_check
    _
  $region27: #{run_model.1} parent=0 // pred_check_branch
    %25 = sbr.rel (0) target = $region29
  $region28: #{run_model.1} parent=0 // pred_region
    _
  $region29: #{run_model.1} parent=0 // pred_fallthru
    _
  %v26 = vld [vmem:[%s0] sm:$0xff]
  %v27 = vld [vmem:[%s0 + $0x8] sm:$0xff]
  %v28 = vld [vmem:[%s0 + $0x10] sm:$0xff]
  %v29 = vld [vmem:[%s0 + $0x18] sm:$0xff]
  %v30 = vld [vmem:[%s0 + $0x20] sm:$0xff]
  %v31 = vld [vmem:[%s0 + $0x28] sm:$0xff]
  %v32 = vld [vmem:[%s0 + $0x30] sm:$0xff]
  %v33 = vld [vmem:[%s0 + $0x38] sm:$0xff]
  %v34 = vld [vmem:[%s0 + $0x40] sm:$0xff]
  %v35 = vld [vmem:[%s0 + $0x48] sm:$0xff]
  %v36 = vld [vmem:[%s0 + $0x50] sm:$0xff]
  %v37 = vld [vmem:[%s0 + $0x58] sm:$0xff]
  %v38 = vld [vmem:[%s0 + $0x60] sm:$0xff]
  %v39 = vld [vmem:[%s0 + $0x68] sm:$0xff]
  %v40 = vld [vmem:[%s0 + $0x70] sm:$0xff]
  %v41 = vld [vmem:[%s0 + $0x78] sm:$0xff]
  %v42 = vld [vmem:[%s1] sm:$0xff]
  %v43 = vld [vmem:[%s1 + $0x8] sm:$0xff]
  %v44 = vld [vmem:[%s1 + $0x10] sm:$0xff]
  %v45 = vld [vmem:[%s1 + $0x18] sm:$0xff]
  %v46 = vld [vmem:[%s1 + $0x20] sm:$0xff]
  %v47 = vld [vmem:[%s1 + $0x28] sm:$0xff]
  %v48 = vld [vmem:[%s1 + $0x30] sm:$0xff]
  %v49 = vld [vmem:[%s1 + $0x38] sm:$0xff]
  %v50 = vld [vmem:[%s1 + $0x40] sm:$0xff]
  %v51 = vld [vmem:[%s1 + $0x48] sm:$0xff]
  %v52 = vld [vmem:[%s1 + $0x50] sm:$0xff]
  %v53 = vld [vmem:[%s1 + $0x58] sm:$0xff]
  %v54 = vld [vmem:[%s1 + $0x60] sm:$0xff]
  %v55 = vld [vmem:[%s1 + $0x68] sm:$0xff]
  %v56 = vld [vmem:[%s1 + $0x70] sm:$0xff]
  %v57 = vld [vmem:[%s1 + $0x78] sm:$0xff]
  %v58 = vld [vmem:[%s1 + $0x80] sm:$0xff]
  %v59 = vld [vmem:[%s1 + $0x88] sm:$0xff]
  %v60 = vld [vmem:[%s1 + $0x90] sm:$0xff]
  %v61 = vld [vmem:[%s1 + $0x98] sm:$0xff]
  %v62 = vld [vmem:[%s1 + $0xa0] sm:$0xff]
  %v63 = vld [vmem:[%s1 + $0xa8] sm:$0xff]
  %v64 = vld [vmem:[%s1 + $0xb0] sm:$0xff]
  %v65 = vld [vmem:[%s1 + $0xb8] sm:$0xff]
  %v66 = vld [vmem:[%s1 + $0xc0] sm:$0xff]
  %v67 = vld [vmem:[%s1 + $0xc8] sm:$0xff]
  %v68 = vld [vmem:[%s1 + $0xd0] sm:$0xff]
  %v69 = vld [vmem:[%s1 + $0xd8] sm:$0xff]
  %v70 = vld [vmem:[%s1 + $0xe0] sm:$0xff]
  %v71 = vld [vmem:[%s1 + $0xe8] sm:$0xff]
  %v72 = vld [vmem:[%s1 + $0xf0] sm:$0xff]
  %v73 = vld [vmem:[%s1 + $0xf8] sm:$0xff]
  %v74 = vld [vmem:[%s1 + $0x100] sm:$0xff]
  %v75 = vld [vmem:[%s1 + $0x108] sm:$0xff]
  %v76 = vld [vmem:[%s1 + $0x110] sm:$0xff]
  %v77 = vld [vmem:[%s1 + $0x118] sm:$0xff]
  %v78 = vld [vmem:[%s1 + $0x120] sm:$0xff]
  %v79 = vld [vmem:[%s1 + $0x128] sm:$0xff]
  %v80 = vld [vmem:[%s1 + $0x130] sm:$0xff]
  %v81 = vld [vmem:[%s1 + $0x138] sm:$0xff]
  %v82 = vld [vmem:[%s1 + $0x140] sm:$0xff]
  %v83 = vld [vmem:[%s1 + $0x148] sm:$0xff]
  %v84 = vld [vmem:[%s1 + $0x150] sm:$0xff]
  %v85 = vld [vmem:[%s1 + $0x158] sm:$0xff]
  %v86 = vld [vmem:[%s1 + $0x160] sm:$0xff]
  %v87 = vld [vmem:[%s1 + $0x168] sm:$0xff]
  %v88 = vld [vmem:[%s1 + $0x170] sm:$0xff]
  %v89 = vld [vmem:[%s1 + $0x178] sm:$0xff]
  %v90 = vld [vmem:[%s1 + $0x180] sm:$0xff]
  %v91 = vld [vmem:[%s1 + $0x188] sm:$0xff]
  %v92 = vld [vmem:[%s1 + $0x190] sm:$0xff]
  %v93 = vld [vmem:[%s1 + $0x198] sm:$0xff]
  %v94 = vld [vmem:[%s1 + $0x1a0] sm:$0xff]
  %v95 = vld [vmem:[%s1 + $0x1a8] sm:$0xff]
  %v96 = vld [vmem:[%s1 + $0x1b0] sm:$0xff]
  %v97 = vld [vmem:[%s1 + $0x1b8] sm:$0xff]
  %v98 = vld [vmem:[%s1 + $0x1c0] sm:$0xff]
  %v99 = vld [vmem:[%s1 + $0x1c8] sm:$0xff]
  %v100 = vld [vmem:[%s1 + $0x1d0] sm:$0xff]
  %v101 = vld [vmem:[%s1 + $0x1d8] sm:$0xff]
  %v102 = vld [vmem:[%s1 + $0x1e0] sm:$0xff]
  %v103 = vld [vmem:[%s1 + $0x1e8] sm:$0xff]
  %v104 = vld [vmem:[%s1 + $0x1f0] sm:$0xff]
  %v105 = vld [vmem:[%s1 + $0x1f8] sm:$0xff]
  %v106 = vld [vmem:[%s1 + $0x200] sm:$0xff]
  %v107 = vld [vmem:[%s1 + $0x208] sm:$0xff]
  %v108 = vld [vmem:[%s1 + $0x210] sm:$0xff]
  %v109 = vld [vmem:[%s1 + $0x218] sm:$0xff]
  %v110 = vld [vmem:[%s1 + $0x220] sm:$0xff]
  %v111 = vld [vmem:[%s1 + $0x228] sm:$0xff]
  %v112 = vld [vmem:[%s1 + $0x230] sm:$0xff]
  %v113 = vld [vmem:[%s1 + $0x238] sm:$0xff]
  %v114 = vld [vmem:[%s1 + $0x240] sm:$0xff]
  %v115 = vld [vmem:[%s1 + $0x248] sm:$0xff]
  %v116 = vld [vmem:[%s1 + $0x250] sm:$0xff]
  %v117 = vld [vmem:[%s1 + $0x258] sm:$0xff]
  %v118 = vld [vmem:[%s1 + $0x260] sm:$0xff]
  %v119 = vld [vmem:[%s1 + $0x268] sm:$0xff]
  %v120 = vld [vmem:[%s1 + $0x270] sm:$0xff]
  %v121 = vld [vmem:[%s1 + $0x278] sm:$0xff]
  %v122 = vld [vmem:[%s1 + $0x280] sm:$0xff]
  %v123 = vld [vmem:[%s1 + $0x288] sm:$0xff]
  %v124 = vld [vmem:[%s1 + $0x290] sm:$0xff]
  %v125 = vld [vmem:[%s1 + $0x298] sm:$0xff]
  %v126 = vld [vmem:[%s1 + $0x2a0] sm:$0xff]
  %v127 = vld [vmem:[%s1 + $0x2a8] sm:$0xff]
  %v128 = vld [vmem:[%s1 + $0x2b0] sm:$0xff]
  %v129 = vld [vmem:[%s1 + $0x2b8] sm:$0xff]
  %v130 = vld [vmem:[%s1 + $0x2c0] sm:$0xff]
  %v131 = vld [vmem:[%s1 + $0x2c8] sm:$0xff]
  %v132 = vld [vmem:[%s1 + $0x2d0] sm:$0xff]
  %v133 = vld [vmem:[%s1 + $0x2d8] sm:$0xff]
  %v134 = vld [vmem:[%s1 + $0x2e0] sm:$0xff]
  %v135 = vld [vmem:[%s1 + $0x2e8] sm:$0xff]
  %v136 = vld [vmem:[%s1 + $0x2f0] sm:$0xff]
  %v137 = vld [vmem:[%s1 + $0x2f8] sm:$0xff]
  %v138 = vld [vmem:[%s1 + $0x300] sm:$0xff]
  %v139 = vld [vmem:[%s1 + $0x308] sm:$0xff]
  %v140 = vld [vmem:[%s1 + $0x310] sm:$0xff]
  %v141 = vld [vmem:[%s1 + $0x318] sm:$0xff]
  %v142 = vld [vmem:[%s1 + $0x320] sm:$0xff]
  %v143 = vld [vmem:[%s1 + $0x328] sm:$0xff]
  %v144 = vld [vmem:[%s1 + $0x330] sm:$0xff]
  %v145 = vld [vmem:[%s1 + $0x338] sm:$0xff]
  %v146 = vld [vmem:[%s1 + $0x340] sm:$0xff]
  %v147 = vld [vmem:[%s1 + $0x348] sm:$0xff]
  %v148 = vld [vmem:[%s1 + $0x350] sm:$0xff]
  %v149 = vld [vmem:[%s1 + $0x358] sm:$0xff]
  %v150 = vld [vmem:[%s1 + $0x360] sm:$0xff]
  %v151 = vld [vmem:[%s1 + $0x368] sm:$0xff]
  %v152 = vld [vmem:[%s1 + $0x370] sm:$0xff]
  %v153 = vld [vmem:[%s1 + $0x378] sm:$0xff]
  %v154 = vld [vmem:[%s1 + $0x380] sm:$0xff]
  %v155 = vld [vmem:[%s1 + $0x388] sm:$0xff]
  %v156 = vld [vmem:[%s1 + $0x390] sm:$0xff]
  %v157 = vld [vmem:[%s1 + $0x398] sm:$0xff]
  %v158 = vld [vmem:[%s1 + $0x3a0] sm:$0xff]
  %v159 = vld [vmem:[%s1 + $0x3a8] sm:$0xff]
  %v160 = vld [vmem:[%s1 + $0x3b0] sm:$0xff]
  %v161 = vld [vmem:[%s1 + $0x3b8] sm:$0xff]
  %v162 = vld [vmem:[%s1 + $0x3c0] sm:$0xff]
  %v163 = vld [vmem:[%s1 + $0x3c8] sm:$0xff]
  %v164 = vld [vmem:[%s1 + $0x3d0] sm:$0xff]
  %v165 = vld [vmem:[%s1 + $0x3d8] sm:$0xff]
  %v166 = vld [vmem:[%s1 + $0x3e0] sm:$0xff]
  %v167 = vld [vmem:[%s1 + $0x3e8] sm:$0xff]
  %v168 = vld [vmem:[%s1 + $0x3f0] sm:$0xff]
  %v169 = vld [vmem:[%s1 + $0x3f8] sm:$0xff]
  %170 = vmatprep.subr.mxu0 %v43
  %171 = vmatpush1.msra.mxu0 %v42
  %172 = vmatprep.subr.mxu0 %v45
  %173 = vmatpush1.msra.mxu0 %v44
  %174 = vmatprep.subr.mxu0 %v47
  %175 = vmatpush1.msra.mxu0 %v46
  %176 = vmatprep.subr.mxu0 %v49
  %177 = vmatpush1.msra.mxu0 %v48
  %178 = vmatprep.subr.mxu0 %v51
  %179 = vmatpush1.msra.mxu0 %v50
  %180 = vmatprep.subr.mxu0 %v53
  %181 = vmatpush1.msra.mxu0 %v52
  %182 = vmatprep.subr.mxu0 %v55
  %183 = vmatpush1.msra.mxu0 %v54
  %184 = vmatprep.subr.mxu0 %v57
  %185 = vmatpush1.msra.mxu0 %v56
  %186 = vmatprep.subr.mxu0 %v59
  %187 = vmatpush1.msra.mxu0 %v58
  %188 = vmatprep.subr.mxu0 %v61
  %189 = vmatpush1.msra.mxu0 %v60
  %190 = vmatprep.subr.mxu0 %v63
  %191 = vmatpush1.msra.mxu0 %v62
  %192 = vmatprep.subr.mxu0 %v65
  %193 = vmatpush1.msra.mxu0 %v64
  %194 = vmatprep.subr.mxu0 %v67
  %195 = vmatpush1.msra.mxu0 %v66
  %196 = vmatprep.subr.mxu0 %v69
  %197 = vmatpush1.msra.mxu0 %v68
  %198 = vmatprep.subr.mxu0 %v71
  %199 = vmatpush1.msra.mxu0 %v70
  %200 = vmatprep.subr.mxu0 %v73
  %201 = vmatpush1.msra.mxu0 %v72
  %202 = vmatprep.subr.mxu0 %v75
  %203 = vmatpush1.msra.mxu0 %v74
  %204 = vmatprep.subr.mxu0 %v77
  %205 = vmatpush1.msra.mxu0 %v76
  %206 = vmatprep.subr.mxu0 %v79
  %207 = vmatpush1.msra.mxu0 %v78
  %208 = vmatprep.subr.mxu0 %v81
  %209 = vmatpush1.msra.mxu0 %v80
  %210 = vmatprep.subr.mxu0 %v83
  %211 = vmatpush1.msra.mxu0 %v82
  %212 = vmatprep.subr.mxu0 %v85
  %213 = vmatpush1.msra.mxu0 %v84
  %214 = vmatprep.subr.mxu0 %v87
  %215 = vmatpush1.msra.mxu0 %v86
  %216 = vmatprep.subr.mxu0 %v89
  %217 = vmatpush1.msra.mxu0 %v88
  %218 = vmatprep.subr.mxu0 %v91
  %219 = vmatpush1.msra.mxu0 %v90
  %220 = vmatprep.subr.mxu0 %v93
  %221 = vmatpush1.msra.mxu0 %v92
  %222 = vmatprep.subr.mxu0 %v95
  %223 = vmatpush1.msra.mxu0 %v94
  %224 = vmatprep.subr.mxu0 %v97
  %225 = vmatpush1.msra.mxu0 %v96
  %226 = vmatprep.subr.mxu0 %v99
  %227 = vmatpush1.msra.mxu0 %v98
  %228 = vmatprep.subr.mxu0 %v101
  %229 = vmatpush1.msra.mxu0 %v100
  %230 = vmatprep.subr.mxu0 %v103
  %231 = vmatpush1.msra.mxu0 %v102
  %232 = vmatprep.subr.mxu0 %v105
  %233 = vmatpush1.msra.mxu0 %v104
  %234 = vmatprep.mubr.f32.mxu0 %v27
  %235 = vmatmul.mubr.f32.gmra.mrb[0].mxu0 %v26
  %v236 = vpop.f32.mrb[0].mxu0
  %v237 = vadd.f32 0.0, %v236
  %v238 = vpop.f32.mrb[0].mxu0
  %v239 = vadd.f32 0.0, %v238
  %240 = vmatprep.mubr.f32.mxu0 %v31
  %241 = vmatmul.mubr.f32.gmra.mrb[0].mxu0 %v30
  %v242 = vpop.f32.mrb[0].mxu0
  %v243 = vadd.f32 0.0, %v242
  %v244 = vpop.f32.mrb[0].mxu0
  %v245 = vadd.f32 0.0, %v244
  %246 = vmatprep.mubr.f32.mxu0 %v35
  %247 = vmatmul.mubr.f32.gmra.mrb[0].mxu0 %v34
  %v248 = vpop.f32.mrb[0].mxu0
  %v249 = vadd.f32 0.0, %v248
  %v250 = vpop.f32.mrb[0].mxu0
  %v251 = vadd.f32 0.0, %v250
  %252 = vmatprep.mubr.f32.mxu0 %v39
  %253 = vmatmul.mubr.f32.gmra.mrb[0].mxu0 %v38
  %v254 = vpop.f32.mrb[0].mxu0
  %v255 = vadd.f32 0.0, %v254
  %v256 = vpop.f32.mrb[0].mxu0
  %v257 = vadd.f32 0.0, %v256
  %258 = vdwg.mxu0
  %259 = vmatprep.subr.mxu0 %v107
  %260 = vmatpush1.msra.mxu0 %v106
  %261 = vmatprep.subr.mxu0 %v109
  %262 = vmatpush1.msra.mxu0 %v108
  %263 = vmatprep.subr.mxu0 %v111
  %264 = vmatpush1.msra.mxu0 %v110
  %265 = vmatprep.subr.mxu0 %v113
  %266 = vmatpush1.msra.mxu0 %v112
  %267 = vmatprep.subr.mxu0 %v115
  %268 = vmatpush1.msra.mxu0 %v114
  %269 = vmatprep.subr.mxu0 %v117
  %270 = vmatpush1.msra.mxu0 %v116
  %271 = vmatprep.subr.mxu0 %v119
  %272 = vmatpush1.msra.mxu0 %v118
  %273 = vmatprep.subr.mxu0 %v121
  %274 = vmatpush1.msra.mxu0 %v120
  %275 = vmatprep.subr.mxu0 %v123
  %276 = vmatpush1.msra.mxu0 %v122
  %277 = vmatprep.subr.mxu0 %v125
  %278 = vmatpush1.msra.mxu0 %v124
  %279 = vmatprep.subr.mxu0 %v127
  %280 = vmatpush1.msra.mxu0 %v126
  %281 = vmatprep.subr.mxu0 %v129
  %282 = vmatpush1.msra.mxu0 %v128
  %283 = vmatprep.subr.mxu0 %v131
  %284 = vmatpush1.msra.mxu0 %v130
  %285 = vmatprep.subr.mxu0 %v133
  %286 = vmatpush1.msra.mxu0 %v132
  %287 = vmatprep.subr.mxu0 %v135
  %288 = vmatpush1.msra.mxu0 %v134
  %289 = vmatprep.subr.mxu0 %v137
  %290 = vmatpush1.msra.mxu0 %v136
  %291 = vmatprep.subr.mxu0 %v139
  %292 = vmatpush1.msra.mxu0 %v138
  %293 = vmatprep.subr.mxu0 %v141
  %294 = vmatpush1.msra.mxu0 %v140
  %295 = vmatprep.subr.mxu0 %v143
  %296 = vmatpush1.msra.mxu0 %v142
  %297 = vmatprep.subr.mxu0 %v145
  %298 = vmatpush1.msra.mxu0 %v144
  %299 = vmatprep.subr.mxu0 %v147
  %300 = vmatpush1.msra.mxu0 %v146
  %301 = vmatprep.subr.mxu0 %v149
  %302 = vmatpush1.msra.mxu0 %v148
  %303 = vmatprep.subr.mxu0 %v151
  %304 = vmatpush1.msra.mxu0 %v150
  %305 = vmatprep.subr.mxu0 %v153
  %306 = vmatpush1.msra.mxu0 %v152
  %307 = vmatprep.subr.mxu0 %v155
  %308 = vmatpush1.msra.mxu0 %v154
  %309 = vmatprep.subr.mxu0 %v157
  %310 = vmatpush1.msra.mxu0 %v156
  %311 = vmatprep.subr.mxu0 %v159
  %312 = vmatpush1.msra.mxu0 %v158
  %313 = vmatprep.subr.mxu0 %v161
  %314 = vmatpush1.msra.mxu0 %v160
  %315 = vmatprep.subr.mxu0 %v163
  %316 = vmatpush1.msra.mxu0 %v162
  %317 = vmatprep.subr.mxu0 %v165
  %318 = vmatpush1.msra.mxu0 %v164
  %319 = vmatprep.subr.mxu0 %v167
  %320 = vmatpush1.msra.mxu0 %v166
  %321 = vmatprep.subr.mxu0 %v169
  %322 = vmatpush1.msra.mxu0 %v168
  %323 = vmatprep.mubr.f32.mxu0 %v29
  %324 = vmatmul.mubr.f32.gmra.mrb[0].mxu0 %v28
  %v325 = vpop.f32.mrb[0].mxu0
  %v326 = vadd.f32 %v237, %v325
  %v327 = vpop.f32.mrb[0].mxu0
  %v328 = vadd.f32 %v239, %v327
  %329 = vmatprep.mubr.f32.mxu0 %v33
  %330 = vmatmul.mubr.f32.gmra.mrb[0].mxu0 %v32
  %v331 = vpop.f32.mrb[0].mxu0
  %v332 = vadd.f32 %v243, %v331
  %v333 = vpop.f32.mrb[0].mxu0
  %v334 = vadd.f32 %v245, %v333
  %335 = vmatprep.mubr.f32.mxu0 %v37
  %336 = vmatmul.mubr.f32.gmra.mrb[0].mxu0 %v36
  %v337 = vpop.f32.mrb[0].mxu0
  %v338 = vadd.f32 %v249, %v337
  %v339 = vpop.f32.mrb[0].mxu0
  %v340 = vadd.f32 %v251, %v339
  %341 = vmatprep.mubr.f32.mxu0 %v41
  %342 = vmatmul.mubr.f32.gmra.mrb[0].mxu0 %v40
  %v343 = vpop.f32.mrb[0].mxu0
  %v344 = vadd.f32 %v255, %v343
  %v345 = vpop.f32.mrb[0].mxu0
  %v346 = vadd.f32 %v257, %v345
  %347 = vdwg.mxu0
  %v348 = vadd.f32 %v326, %v332
  %v349 = vadd.f32 %v348, %v338
  %v350 = vadd.f32 %v349, %v344
  %v351 = vrot.slane %v350, 4
  %v352 = vadd.f32 %v350, %v351
  %v353 = vrot.slane %v352, 2
  %v354 = vadd.f32 %v352, %v353
  %v355 = vrot.slane %v354, 1
  %v356 = vadd.f32 %v354, %v355
  %v357 = vadd.f32 %v328, %v334
  %v358 = vadd.f32 %v357, %v340
  %v359 = vadd.f32 %v358, %v346
  %v360 = vrot.slane %v359, 4
  %v361 = vadd.f32 %v359, %v360
  %v362 = vrot.slane %v361, 2
  %v363 = vadd.f32 %v361, %v362
  %v364 = vrot.slane %v363, 1
  %v365 = vadd.f32 %v363, %v364
  %v366 = vmul.f32 %v326, %v326
  %v367 = vmul.f32 %v328, %v328
  %v368 = vmul.f32 %v332, %v332
  %v369 = vmul.f32 %v334, %v334
  %v370 = vmul.f32 %v338, %v338
  %v371 = vmul.f32 %v340, %v340
  %v372 = vmul.f32 %v344, %v344
  %v373 = vmul.f32 %v346, %v346
  %v374 = vadd.f32 %v366, %v368
  %v375 = vadd.f32 %v374, %v370
  %v376 = vadd.f32 %v375, %v372
  %v377 = vrot.slane %v376, 4
  %v378 = vadd.f32 %v376, %v377
  %v379 = vrot.slane %v378, 2
  %v380 = vadd.f32 %v378, %v379
  %v381 = vrot.slane %v380, 1
  %v382 = vadd.f32 %v380, %v381
  %v383 = vadd.f32 %v367, %v369
  %v384 = vadd.f32 %v383, %v371
  %v385 = vadd.f32 %v384, %v373
  %v386 = vrot.slane %v385, 4
  %v387 = vadd.f32 %v385, %v386
  %v388 = vrot.slane %v387, 2
  %v389 = vadd.f32 %v387, %v388
  %v390 = vrot.slane %v389, 1
  %v391 = vadd.f32 %v389, %v390
  %v392 = vld [vmem:[%s2] sm:$0xff]
  %v393 = vld [vmem:[%s2 + $0x8] sm:$0xff]
  %v394 = vld [vmem:[%s2 + $0x10] sm:$0xff]
  %v395 = vld [vmem:[%s2 + $0x18] sm:$0xff]
  %v396 = vld [vmem:[%s2 + $0x20] sm:$0xff]
  %v397 = vld [vmem:[%s2 + $0x28] sm:$0xff]
  %v398 = vld [vmem:[%s2 + $0x30] sm:$0xff]
  %v399 = vld [vmem:[%s2 + $0x38] sm:$0xff]
  %v400 = vld [vmem:[%s2 + $0x40] sm:$0xff]
  %v401 = vld [vmem:[%s2 + $0x48] sm:$0xff]
  %v402 = vld [vmem:[%s2 + $0x50] sm:$0xff]
  %v403 = vld [vmem:[%s2 + $0x58] sm:$0xff]
  %v404 = vld [vmem:[%s2 + $0x60] sm:$0xff]
  %v405 = vld [vmem:[%s2 + $0x68] sm:$0xff]
  %v406 = vld [vmem:[%s2 + $0x70] sm:$0xff]
  %v407 = vld [vmem:[%s2 + $0x78] sm:$0xff]
  %v408 = vld [vmem:[%s2 + $0x80] sm:$0xff]
  %v409 = vld [vmem:[%s2 + $0x88] sm:$0xff]
  %v410 = vld [vmem:[%s2 + $0x90] sm:$0xff]
  %v411 = vld [vmem:[%s2 + $0x98] sm:$0xff]
  %v412 = vld [vmem:[%s2 + $0xa0] sm:$0xff]
  %v413 = vld [vmem:[%s2 + $0xa8] sm:$0xff]
  %v414 = vld [vmem:[%s2 + $0xb0] sm:$0xff]
  %v415 = vld [vmem:[%s2 + $0xb8] sm:$0xff]
  %v416 = vld [vmem:[%s2 + $0xc0] sm:$0xff]
  %v417 = vld [vmem:[%s2 + $0xc8] sm:$0xff]
  %v418 = vld [vmem:[%s2 + $0xd0] sm:$0xff]
  %v419 = vld [vmem:[%s2 + $0xd8] sm:$0xff]
  %v420 = vld [vmem:[%s2 + $0xe0] sm:$0xff]
  %v421 = vld [vmem:[%s2 + $0xe8] sm:$0xff]
  %v422 = vld [vmem:[%s2 + $0xf0] sm:$0xff]
  %v423 = vld [vmem:[%s2 + $0xf8] sm:$0xff]
  %v424 = vld [vmem:[%s2 + $0x100] sm:$0xff]
  %v425 = vld [vmem:[%s2 + $0x108] sm:$0xff]
  %v426 = vld [vmem:[%s2 + $0x110] sm:$0xff]
  %v427 = vld [vmem:[%s2 + $0x118] sm:$0xff]
  %v428 = vld [vmem:[%s2 + $0x120] sm:$0xff]
  %v429 = vld [vmem:[%s2 + $0x128] sm:$0xff]
  %v430 = vld [vmem:[%s2 + $0x130] sm:$0xff]
  %v431 = vld [vmem:[%s2 + $0x138] sm:$0xff]
  %v432 = vld [vmem:[%s2 + $0x140] sm:$0xff]
  %v433 = vld [vmem:[%s2 + $0x148] sm:$0xff]
  %v434 = vld [vmem:[%s2 + $0x150] sm:$0xff]
  %v435 = vld [vmem:[%s2 + $0x158] sm:$0xff]
  %v436 = vld [vmem:[%s2 + $0x160] sm:$0xff]
  %v437 = vld [vmem:[%s2 + $0x168] sm:$0xff]
  %v438 = vld [vmem:[%s2 + $0x170] sm:$0xff]
  %v439 = vld [vmem:[%s2 + $0x178] sm:$0xff]
  %v440 = vld [vmem:[%s2 + $0x180] sm:$0xff]
  %v441 = vld [vmem:[%s2 + $0x188] sm:$0xff]
  %v442 = vld [vmem:[%s2 + $0x190] sm:$0xff]
  %v443 = vld [vmem:[%s2 + $0x198] sm:$0xff]
  %v444 = vld [vmem:[%s2 + $0x1a0] sm:$0xff]
  %v445 = vld [vmem:[%s2 + $0x1a8] sm:$0xff]
  %v446 = vld [vmem:[%s2 + $0x1b0] sm:$0xff]
  %v447 = vld [vmem:[%s2 + $0x1b8] sm:$0xff]
  %v448 = vld [vmem:[%s2 + $0x1c0] sm:$0xff]
  %v449 = vld [vmem:[%s2 + $0x1c8] sm:$0xff]
  %v450 = vld [vmem:[%s2 + $0x1d0] sm:$0xff]
  %v451 = vld [vmem:[%s2 + $0x1d8] sm:$0xff]
  %v452 = vld [vmem:[%s2 + $0x1e0] sm:$0xff]
  %v453 = vld [vmem:[%s2 + $0x1e8] sm:$0xff]
  %v454 = vld [vmem:[%s2 + $0x1f0] sm:$0xff]
  %v455 = vld [vmem:[%s2 + $0x1f8] sm:$0xff]
  %456 = vmatprep.subr.mxu0 %v393
  %457 = vmatpush1.msra.mxu0 %v392
  %458 = vmatprep.subr.mxu0 %v395
  %459 = vmatpush1.msra.mxu0 %v394
  %460 = vmatprep.subr.mxu0 %v397
  %461 = vmatpush1.msra.mxu0 %v396
  %462 = vmatprep.subr.mxu0 %v399
  %463 = vmatpush1.msra.mxu0 %v398
  %464 = vmatprep.subr.mxu0 %v401
  %465 = vmatpush1.msra.mxu0 %v400
  %466 = vmatprep.subr.mxu0 %v403
  %467 = vmatpush1.msra.mxu0 %v402
  %468 = vmatprep.subr.mxu0 %v405
  %469 = vmatpush1.msra.mxu0 %v404
  %470 = vmatprep.subr.mxu0 %v407
  %471 = vmatpush1.msra.mxu0 %v406
  %472 = vmatprep.subr.mxu0 %v409
  %473 = vmatpush1.msra.mxu0 %v408
  %474 = vmatprep.subr.mxu0 %v411
  %475 = vmatpush1.msra.mxu0 %v410
  %476 = vmatprep.subr.mxu0 %v413
  %477 = vmatpush1.msra.mxu0 %v412
  %478 = vmatprep.subr.mxu0 %v415
  %479 = vmatpush1.msra.mxu0 %v414
  %480 = vmatprep.subr.mxu0 %v417
  %481 = vmatpush1.msra.mxu0 %v416
  %482 = vmatprep.subr.mxu0 %v419
  %483 = vmatpush1.msra.mxu0 %v418
  %484 = vmatprep.subr.mxu0 %v421
  %485 = vmatpush1.msra.mxu0 %v420
  %486 = vmatprep.subr.mxu0 %v423
  %487 = vmatpush1.msra.mxu0 %v422
  %488 = vmatprep.subr.mxu0 %v425
  %489 = vmatpush1.msra.mxu0 %v424
  %490 = vmatprep.subr.mxu0 %v427
  %491 = vmatpush1.msra.mxu0 %v426
  %492 = vmatprep.subr.mxu0 %v429
  %493 = vmatpush1.msra.mxu0 %v428
  %494 = vmatprep.subr.mxu0 %v431
  %495 = vmatpush1.msra.mxu0 %v430
  %496 = vmatprep.subr.mxu0 %v433
  %497 = vmatpush1.msra.mxu0 %v432
  %498 = vmatprep.subr.mxu0 %v435
  %499 = vmatpush1.msra.mxu0 %v434
  %500 = vmatprep.subr.mxu0 %v437
  %501 = vmatpush1.msra.mxu0 %v436
  %502 = vmatprep.subr.mxu0 %v439
  %503 = vmatpush1.msra.mxu0 %v438
  %504 = vmatprep.subr.mxu0 %v441
  %505 = vmatpush1.msra.mxu0 %v440
  %506 = vmatprep.subr.mxu0 %v443
  %507 = vmatpush1.msra.mxu0 %v442
  %508 = vmatprep.subr.mxu0 %v445
  %509 = vmatpush1.msra.mxu0 %v444
  %510 = vmatprep.subr.mxu0 %v447
  %511 = vmatpush1.msra.mxu0 %v446
  %512 = vmatprep.subr.mxu0 %v449
  %513 = vmatpush1.msra.mxu0 %v448
  %514 = vmatprep.subr.mxu0 %v451
  %515 = vmatpush1.msra.mxu0 %v450
  %516 = vmatprep.subr.mxu0 %v453
  %517 = vmatpush1.msra.mxu0 %v452
  %518 = vmatprep.subr.mxu0 %v455
  %519 = vmatpush1.msra.mxu0 %v454
  %520 = vmatprep.mubr.f32.mxu0 %v365
  %521 = vmatmul.mubr.f32.gmra.mrb[0].mxu0 %v356
  %v522 = vpop.f32.mrb[0].mxu0
  %v523 = vadd.f32 0.0, %v522
  %v524 = vpop.f32.mrb[0].mxu0
  %v525 = vadd.f32 0.0, %v524
  %526 = vdwg.mxu0
  %527 = vmatprep.subr.mxu0 %v393
  %528 = vmatpush1.msra.mxu0 %v392
  %529 = vmatprep.subr.mxu0 %v395
  %530 = vmatpush1.msra.mxu0 %v394
  %531 = vmatprep.subr.mxu0 %v397
  %532 = vmatpush1.msra.mxu0 %v396
  %533 = vmatprep.subr.mxu0 %v399
  %534 = vmatpush1.msra.mxu0 %v398
  %535 = vmatprep.subr.mxu0 %v401
  %536 = vmatpush1.msra.mxu0 %v400
  %537 = vmatprep.subr.mxu0 %v403
  %538 = vmatpush1.msra.mxu0 %v402
  %539 = vmatprep.subr.mxu0 %v405
  %540 = vmatpush1.msra.mxu0 %v404
  %541 = vmatprep.subr.mxu0 %v407
  %542 = vmatpush1.msra.mxu0 %v406
  %543 = vmatprep.subr.mxu0 %v409
  %544 = vmatpush1.msra.mxu0 %v408
  %545 = vmatprep.subr.mxu0 %v411
  %546 = vmatpush1.msra.mxu0 %v410
  %547 = vmatprep.subr.mxu0 %v413
  %548 = vmatpush1.msra.mxu0 %v412
  %549 = vmatprep.subr.mxu0 %v415
  %550 = vmatpush1.msra.mxu0 %v414
  %551 = vmatprep.subr.mxu0 %v417
  %552 = vmatpush1.msra.mxu0 %v416
  %553 = vmatprep.subr.mxu0 %v419
  %554 = vmatpush1.msra.mxu0 %v418
  %555 = vmatprep.subr.mxu0 %v421
  %556 = vmatpush1.msra.mxu0 %v420
  %557 = vmatprep.subr.mxu0 %v423
  %558 = vmatpush1.msra.mxu0 %v422
  %559 = vmatprep.subr.mxu0 %v425
  %560 = vmatpush1.msra.mxu0 %v424
  %561 = vmatprep.subr.mxu0 %v427
  %562 = vmatpush1.msra.mxu0 %v426
  %563 = vmatprep.subr.mxu0 %v429
  %564 = vmatpush1.msra.mxu0 %v428
  %565 = vmatprep.subr.mxu0 %v431
  %566 = vmatpush1.msra.mxu0 %v430
  %567 = vmatprep.subr.mxu0 %v433
  %568 = vmatpush1.msra.mxu0 %v432
  %569 = vmatprep.subr.mxu0 %v435
  %570 = vmatpush1.msra.mxu0 %v434
  %571 = vmatprep.subr.mxu0 %v437
  %572 = vmatpush1.msra.mxu0 %v436
  %573 = vmatprep.subr.mxu0 %v439
  %574 = vmatpush1.msra.mxu0 %v438
  %575 = vmatprep.subr.mxu0 %v441
  %576 = vmatpush1.msra.mxu0 %v440
  %577 = vmatprep.subr.mxu0 %v443
  %578 = vmatpush1.msra.mxu0 %v442
  %579 = vmatprep.subr.mxu0 %v445
  %580 = vmatpush1.msra.mxu0 %v444
  %581 = vmatprep.subr.mxu0 %v447
  %582 = vmatpush1.msra.mxu0 %v446
  %583 = vmatprep.subr.mxu0 %v449
  %584 = vmatpush1.msra.mxu0 %v448
  %585 = vmatprep.subr.mxu0 %v451
  %586 = vmatpush1.msra.mxu0 %v450
  %587 = vmatprep.subr.mxu0 %v453
  %588 = vmatpush1.msra.mxu0 %v452
  %589 = vmatprep.subr.mxu0 %v455
  %590 = vmatpush1.msra.mxu0 %v454
  %591 = vmatprep.mubr.f32.mxu0 %v391
  %592 = vmatmul.mubr.f32.gmra.mrb[0].mxu0 %v382
  %v593 = vpop.f32.mrb[0].mxu0
  %v594 = vadd.f32 0.0, %v593
  %v595 = vpop.f32.mrb[0].mxu0
  %v596 = vadd.f32 0.0, %v595
  %597 = vdwg.mxu0
  %v598 = vmul.f32 %v523, %v523
  %v599 = vmul.f32 %v525, %v525
  %v600 = vsub.f32 %v594, %v598
  %v601 = vsub.f32 %v596, %v599
  %v602 = vld [vmem:[%s3] sm:$0x3]
  %v603 = vadd.f32 %v600, 1e-05
  %v604 = vadd.f32 %v601, 1e-05
  %v605 = vrsqrt.pop %v603
  %v606 = vrsqrt.pop %v604
  %v609 = vcombine.low %v605, %v606
  %v611 = vunpack.c.l.s4 1966171168
  %v612 = vunpack.c.0.s8 %v611
  %v613 = vlaneseq
  %v614 = vshrl.u32 %v613, 7
  %v615 = vsub.s32 %v612, %v614
  %v616 = vrot.slane %v609, %v615
  %v618 = vunpack.c.l.s4 1966171168
  %v619 = vunpack.c.0.s8 %v618
  %v620 = vlaneseq
  %v621 = vshrl.u32 %v620, 7
  %v622 = vsub.s32 %v619, %v621
  %v623 = vrot.slane %v616, %v622
  %v625 = vmul.f32 %v602, %v623
  %v626 = vld [vmem:[%s4] sm:$0x3]
  %v628 = vlaneseq
  %v629 = vshrl.u32 %v628, 7
  %v630 = vsub.s32 0, %v629
  %v631 = vrot.slane %v625, %v630
  %v632 = vlaneseq
  %v633 = vshrl.u32 %v632, 7
  %v634 = vsub.s32 1, %v633
  %v635 = vrot.slane %v625, %v634
  %v638 = vmul.f32 %v523, %v631
  %v639 = vmul.f32 %v525, %v635
  %v642 = vcombine.low %v638, %v639
  %v644 = vunpack.c.l.s4 1966171168
  %v645 = vunpack.c.0.s8 %v644
  %v646 = vlaneseq
  %v647 = vshrl.u32 %v646, 7
  %v648 = vsub.s32 %v645, %v647
  %v649 = vrot.slane %v642, %v648
  %v651 = vunpack.c.l.s4 1966171168
  %v652 = vunpack.c.0.s8 %v651
  %v653 = vlaneseq
  %v654 = vshrl.u32 %v653, 7
  %v655 = vsub.s32 %v652, %v654
  %v656 = vrot.slane %v649, %v655
  %v658 = vsub.f32 %v626, %v656
  %v659 = vmul.f32 %v326, %v631
  %v660 = vmul.f32 %v328, %v635
  %v661 = vmul.f32 %v332, %v631
  %v662 = vmul.f32 %v334, %v635
  %v663 = vmul.f32 %v338, %v631
  %v664 = vmul.f32 %v340, %v635
  %v665 = vmul.f32 %v344, %v631
  %v666 = vmul.f32 %v346, %v635
  %v668 = vlaneseq
  %v669 = vshrl.u32 %v668, 7
  %v670 = vsub.s32 0, %v669
  %v671 = vrot.slane %v658, %v670
  %v672 = vlaneseq
  %v673 = vshrl.u32 %v672, 7
  %v674 = vsub.s32 1, %v673
  %v675 = vrot.slane %v658, %v674
  %v678 = vadd.f32 %v659, %v671
  %v679 = vadd.f32 %v660, %v675
  %v680 = vadd.f32 %v661, %v671
  %v681 = vadd.f32 %v662, %v675
  %v682 = vadd.f32 %v663, %v671
  %v683 = vadd.f32 %v664, %v675
  %v684 = vadd.f32 %v665, %v671
  %v685 = vadd.f32 %v666, %v675
  %v686 = vmax.f32 %v678, 0.0
  %v687 = vmax.f32 %v679, 0.0
  %v688 = vmax.f32 %v680, 0.0
  %v689 = vmax.f32 %v681, 0.0
  %v690 = vmax.f32 %v682, 0.0
  %v691 = vmax.f32 %v683, 0.0
  %v692 = vmax.f32 %v684, 0.0
  %v693 = vmax.f32 %v685, 0.0
  %v694 = vld [vmem:[%s5] sm:$0xff]
  %v695 = vld [vmem:[%s5 + $0x8] sm:$0xff]
  %v696 = vld [vmem:[%s5 + $0x10] sm:$0xff]
  %v697 = vld [vmem:[%s5 + $0x18] sm:$0xff]
  %v698 = vld [vmem:[%s5 + $0x20] sm:$0xff]
  %v699 = vld [vmem:[%s5 + $0x28] sm:$0xff]
  %v700 = vld [vmem:[%s5 + $0x30] sm:$0xff]
  %v701 = vld [vmem:[%s5 + $0x38] sm:$0xff]
  %v702 = vld [vmem:[%s5 + $0x40] sm:$0xff]
  %v703 = vld [vmem:[%s5 + $0x48] sm:$0xff]
  %v704 = vld [vmem:[%s5 + $0x50] sm:$0xff]
  %v705 = vld [vmem:[%s5 + $0x58] sm:$0xff]
  %v706 = vld [vmem:[%s5 + $0x60] sm:$0xff]
  %v707 = vld [vmem:[%s5 + $0x68] sm:$0xff]
  %v708 = vld [vmem:[%s5 + $0x70] sm:$0xff]
  %v709 = vld [vmem:[%s5 + $0x78] sm:$0xff]
  %v710 = vld [vmem:[%s5 + $0x80] sm:$0xff]
  %v711 = vld [vmem:[%s5 + $0x88] sm:$0xff]
  %v712 = vld [vmem:[%s5 + $0x90] sm:$0xff]
  %v713 = vld [vmem:[%s5 + $0x98] sm:$0xff]
  %v714 = vld [vmem:[%s5 + $0xa0] sm:$0xff]
  %v715 = vld [vmem:[%s5 + $0xa8] sm:$0xff]
  %v716 = vld [vmem:[%s5 + $0xb0] sm:$0xff]
  %v717 = vld [vmem:[%s5 + $0xb8] sm:$0xff]
  %v718 = vld [vmem:[%s5 + $0xc0] sm:$0xff]
  %v719 = vld [vmem:[%s5 + $0xc8] sm:$0xff]
  %v720 = vld [vmem:[%s5 + $0xd0] sm:$0xff]
  %v721 = vld [vmem:[%s5 + $0xd8] sm:$0xff]
  %v722 = vld [vmem:[%s5 + $0xe0] sm:$0xff]
  %v723 = vld [vmem:[%s5 + $0xe8] sm:$0xff]
  %v724 = vld [vmem:[%s5 + $0xf0] sm:$0xff]
  %v725 = vld [vmem:[%s5 + $0xf8] sm:$0xff]
  %v726 = vld [vmem:[%s5 + $0x100] sm:$0xff]
  %v727 = vld [vmem:[%s5 + $0x108] sm:$0xff]
  %v728 = vld [vmem:[%s5 + $0x110] sm:$0xff]
  %v729 = vld [vmem:[%s5 + $0x118] sm:$0xff]
  %v730 = vld [vmem:[%s5 + $0x120] sm:$0xff]
  %v731 = vld [vmem:[%s5 + $0x128] sm:$0xff]
  %v732 = vld [vmem:[%s5 + $0x130] sm:$0xff]
  %v733 = vld [vmem:[%s5 + $0x138] sm:$0xff]
  %v734 = vld [vmem:[%s5 + $0x140] sm:$0xff]
  %v735 = vld [vmem:[%s5 + $0x148] sm:$0xff]
  %v736 = vld [vmem:[%s5 + $0x150] sm:$0xff]
  %v737 = vld [vmem:[%s5 + $0x158] sm:$0xff]
  %v738 = vld [vmem:[%s5 + $0x160] sm:$0xff]
  %v739 = vld [vmem:[%s5 + $0x168] sm:$0xff]
  %v740 = vld [vmem:[%s5 + $0x170] sm:$0xff]
  %v741 = vld [vmem:[%s5 + $0x178] sm:$0xff]
  %v742 = vld [vmem:[%s5 + $0x180] sm:$0xff]
  %v743 = vld [vmem:[%s5 + $0x188] sm:$0xff]
  %v744 = vld [vmem:[%s5 + $0x190] sm:$0xff]
  %v745 = vld [vmem:[%s5 + $0x198] sm:$0xff]
  %v746 = vld [vmem:[%s5 + $0x1a0] sm:$0xff]
  %v747 = vld [vmem:[%s5 + $0x1a8] sm:$0xff]
  %v748 = vld [vmem:[%s5 + $0x1b0] sm:$0xff]
  %v749 = vld [vmem:[%s5 + $0x1b8] sm:$0xff]
  %v750 = vld [vmem:[%s5 + $0x1c0] sm:$0xff]
  %v751 = vld [vmem:[%s5 + $0x1c8] sm:$0xff]
  %v752 = vld [vmem:[%s5 + $0x1d0] sm:$0xff]
  %v753 = vld [vmem:[%s5 + $0x1d8] sm:$0xff]
  %v754 = vld [vmem:[%s5 + $0x1e0] sm:$0xff]
  %v755 = vld [vmem:[%s5 + $0x1e8] sm:$0xff]
  %v756 = vld [vmem:[%s5 + $0x1f0] sm:$0xff]
  %v757 = vld [vmem:[%s5 + $0x1f8] sm:$0xff]
  %v758 = vld [vmem:[%s6] sm:$0x3]
  %v760 = vlaneseq
  %v761 = vshrl.u32 %v760, 7
  %v762 = vsub.s32 0, %v761
  %v763 = vrot.slane %v758, %v762
  %v764 = vlaneseq
  %v765 = vshrl.u32 %v764, 7
  %v766 = vsub.s32 1, %v765
  %v767 = vrot.slane %v758, %v766
  %770 = vmatprep.subr.mxu0 %v695
  %771 = vmatpush1.msra.mxu0 %v694
  %772 = vmatprep.subr.mxu0 %v697
  %773 = vmatpush1.msra.mxu0 %v696
  %774 = vmatprep.subr.mxu0 %v699
  %775 = vmatpush1.msra.mxu0 %v698
  %776 = vmatprep.subr.mxu0 %v701
  %777 = vmatpush1.msra.mxu0 %v700
  %778 = vmatprep.subr.mxu0 %v703
  %779 = vmatpush1.msra.mxu0 %v702
  %780 = vmatprep.subr.mxu0 %v705
  %781 = vmatpush1.msra.mxu0 %v704
  %782 = vmatprep.subr.mxu0 %v707
  %783 = vmatpush1.msra.mxu0 %v706
  %784 = vmatprep.subr.mxu0 %v709
  %785 = vmatpush1.msra.mxu0 %v708
  %786 = vmatprep.subr.mxu0 %v711
  %787 = vmatpush1.msra.mxu0 %v710
  %788 = vmatprep.subr.mxu0 %v713
  %789 = vmatpush1.msra.mxu0 %v712
  %790 = vmatprep.subr.mxu0 %v715
  %791 = vmatpush1.msra.mxu0 %v714
  %792 = vmatprep.subr.mxu0 %v717
  %793 = vmatpush1.msra.mxu0 %v716
  %794 = vmatprep.subr.mxu0 %v719
  %795 = vmatpush1.msra.mxu0 %v718
  %796 = vmatprep.subr.mxu0 %v721
  %797 = vmatpush1.msra.mxu0 %v720
  %798 = vmatprep.subr.mxu0 %v723
  %799 = vmatpush1.msra.mxu0 %v722
  %800 = vmatprep.subr.mxu0 %v725
  %801 = vmatpush1.msra.mxu0 %v724
  %802 = vmatprep.subr.mxu0 %v727
  %803 = vmatpush1.msra.mxu0 %v726
  %804 = vmatprep.subr.mxu0 %v729
  %805 = vmatpush1.msra.mxu0 %v728
  %806 = vmatprep.subr.mxu0 %v731
  %807 = vmatpush1.msra.mxu0 %v730
  %808 = vmatprep.subr.mxu0 %v733
  %809 = vmatpush1.msra.mxu0 %v732
  %810 = vmatprep.subr.mxu0 %v735
  %811 = vmatpush1.msra.mxu0 %v734
  %812 = vmatprep.subr.mxu0 %v737
  %813 = vmatpush1.msra.mxu0 %v736
  %814 = vmatprep.subr.mxu0 %v739
  %815 = vmatpush1.msra.mxu0 %v738
  %816 = vmatprep.subr.mxu0 %v741
  %817 = vmatpush1.msra.mxu0 %v740
  %818 = vmatprep.subr.mxu0 %v743
  %819 = vmatpush1.msra.mxu0 %v742
  %820 = vmatprep.subr.mxu0 %v745
  %821 = vmatpush1.msra.mxu0 %v744
  %822 = vmatprep.subr.mxu0 %v747
  %823 = vmatpush1.msra.mxu0 %v746
  %824 = vmatprep.subr.mxu0 %v749
  %825 = vmatpush1.msra.mxu0 %v748
  %826 = vmatprep.subr.mxu0 %v751
  %827 = vmatpush1.msra.mxu0 %v750
  %828 = vmatprep.subr.mxu0 %v753
  %829 = vmatpush1.msra.mxu0 %v752
  %830 = vmatprep.subr.mxu0 %v755
  %831 = vmatpush1.msra.mxu0 %v754
  %832 = vmatprep.subr.mxu0 %v757
  %833 = vmatpush1.msra.mxu0 %v756
  %834 = vmatprep.mubr.f32.mxu0 %v687
  %835 = vmatmul.mubr.f32.gmra.mrb[0].mxu0 %v686
  %v836 = vpop.f32.mrb[0].mxu0
  %v837 = vadd.f32 %v763, %v836
  %v838 = vpop.f32.mrb[0].mxu0
  %v839 = vadd.f32 %v767, %v838
  %840 = vmatprep.mubr.f32.mxu0 %v689
  %841 = vmatmul.mubr.f32.gmra.mrb[0].mxu0 %v688
  %v842 = vpop.f32.mrb[0].mxu0
  %v843 = vadd.f32 %v763, %v842
  %v844 = vpop.f32.mrb[0].mxu0
  %v845 = vadd.f32 %v767, %v844
  %846 = vmatprep.mubr.f32.mxu0 %v691
  %847 = vmatmul.mubr.f32.gmra.mrb[0].mxu0 %v690
  %v848 = vpop.f32.mrb[0].mxu0
  %v849 = vadd.f32 %v763, %v848
  %v850 = vpop.f32.mrb[0].mxu0
  %v851 = vadd.f32 %v767, %v850
  %852 = vmatprep.mubr.f32.mxu0 %v693
  %853 = vmatmul.mubr.f32.gmra.mrb[0].mxu0 %v692
  %v854 = vpop.f32.mrb[0].mxu0
  %v855 = vadd.f32 %v763, %v854
  %v856 = vpop.f32.mrb[0].mxu0
  %v857 = vadd.f32 %v767, %v856
  %858 = vdwg.mxu0
  %v859 = vmax.f32 %v837, 0.0
  %v860 = vmax.f32 %v839, 0.0
  %v861 = vmax.f32 %v843, 0.0
  %v862 = vmax.f32 %v845, 0.0
  %v863 = vmax.f32 %v849, 0.0
  %v864 = vmax.f32 %v851, 0.0
  %v865 = vmax.f32 %v855, 0.0
  %v866 = vmax.f32 %v857, 0.0
  %867 = vst [vmem:[%s7] sm:$0xff] %v859
  %868 = vst [vmem:[%s7 + $0x8] sm:$0xff] %v860
  %869 = vst [vmem:[%s7 + $0x10] sm:$0xff] %v861
  %870 = vst [vmem:[%s7 + $0x18] sm:$0xff] %v862
  %871 = vst [vmem:[%s7 + $0x20] sm:$0xff] %v863
  %872 = vst [vmem:[%s7 + $0x28] sm:$0xff] %v864
  %873 = vst [vmem:[%s7 + $0x30] sm:$0xff] %v865
  %874 = vst [vmem:[%s7 + $0x38] sm:$0xff] %v866
  // Predicated region
  $region30: #{run_model.1} parent=0 // pred_check
    _
  $region31: #{run_model.1} parent=0 // pred_check_branch
    %876 = sbr.rel (0) target = $region33
  $region32: #{run_model.1} parent=0 // pred_region
    _
  $region33: #{run_model.1} parent=0 // pred_fallthru
    _
  // Predicated region
  $region34: #{run_model.1} parent=0 // pred_check
    _
  $region35: #{run_model.1} parent=0 // pred_check_branch
    %878 = sbr.rel (0) target = $region37
  $region36: #{run_model.1} parent=0 // pred_region
    _
  $region37: #{run_model.1} parent=0 // pred_fallthru
    _

</llo_original>
